<compile_context>
chip_gen: v6e
topology: v6e:2x2x1
jax: 0.10.0
libtpu: 0.0.40
codegen_flags: <defaults>
</compile_context>

<pallas_src>
import functools

import jax
import jax.numpy as jnp
from jax.experimental import pallas as pl
from jax.experimental.pallas import tpu as pltpu

_LANE = 128
_SUBLANE = 8


def _round_up(x, m):
    return ((x + m - 1) // m) * m


@functools.lru_cache(maxsize=None)
def _tpu_generation():
    """Return (vmem_budget_bytes, mxu_row_tile) for the local TPU generation."""
    try:
        kind = jax.devices()[0].device_kind.lower()
    except Exception:
        kind = ""
    try:
        capacity = int(pltpu.get_tpu_info().vmem_capacity_bytes)
    except Exception:
        capacity = (64 if "v7" in kind else 128) * 1024 * 1024
    # ~75% of 128 MiB on v5e/v6e, ~60% of 64 MiB on v7x.  One number is used
    # for BOTH the tile planner and vmem_limit_bytes so they cannot disagree.
    frac = 0.75 if capacity >= 96 * 1024 * 1024 else 0.60
    mxu = 128 if "v5" in kind else 256  # v5e MXU is 4x128^2; v6e/v7x are 2x256^2
    return int(capacity * frac), mxu


def _plan(B, D, C, w_itemsize, out_itemsize, budget, mxu):
    """Pick (tm, tn, c_out, resident_wb) for out = x @ W + b.

    c_out is the kernel-side column count (C, or C padded to a multiple of
    128); resident_wb says whether W/b stay fully resident in VMEM
    (single-buffered) or are streamed along an output-column grid axis.
    """
    c_pad = _round_up(C, _LANE)
    b_cap = _round_up(max(B, 1), _SUBLANE)

    resident_w_bytes = D * c_pad * w_itemsize + c_pad * 4  # Buffered(1) W + bias
    if resident_w_bytes <= budget // 2:
        # Resident-weight path.  Skip the 128-pad when it would inflate output
        # writeback a lot (tiny class counts): lane-masked stores cost VPU
        # slots but save >=2x HBM write bytes on a memory-bound op, and avoid
        # the trailing column slice entirely.
        c_out = c_pad if c_pad <= 2 * C else C
        tn = c_out
        resident = True
        fixed = D * c_out * w_itemsize + c_out * 4
    else:
        # Large head: stream W along an N grid axis (double-buffered tiles).
        c_out = c_pad
        resident = False
        tn = ((budget * 2 // 5) // (2 * D * w_itemsize)) // _LANE * _LANE
        tn = max(_LANE, min(tn, c_pad))
        fixed = 2 * (D * tn * w_itemsize + tn * 4)

    per_row = 2 * D * 4 + 2 * tn * out_itemsize  # f32 x row + out row, dbl-buf
    avail = budget - fixed
    if avail < per_row * _SUBLANE:
        raise ValueError(
            "linear_pallas: tiling does not fit in the VMEM budget "
            f"(D={D}, C={C}, budget={budget}B); shrink the head or raise the "
            "budget.")

    tm = min(b_cap, avail // per_row)
    if tm >= mxu:
        tm = (tm // mxu) * mxu          # fill the MXU (128 on v5e, 256 else)
    else:
        tm = max((tm // _SUBLANE) * _SUBLANE, _SUBLANE)

    # Guarantee >=2 batch grid steps for mid/large batches so the "parallel"
    # axis can shard across v7x's two TensorCores (extra step costs ~0.35us).
    if tm >= b_cap and b_cap >= 4 * _SUBLANE:
        tm = _round_up((b_cap + 1) // 2, _SUBLANE)

    return tm, tn, c_out, resident


def linear_pallas(x, w, b, *, compute_dtype=jnp.bfloat16, out_dtype=jnp.float32):
    """out = x @ w + b as a single Pallas TPU kernel (f32 accumulation).

    x : (B, D)  streamed in its producer dtype, cast to `compute_dtype` in-kernel.
    w : (D, C)  ideally already in `compute_dtype` (no per-call cast pass then).
    b : (C,) or (1, C)
    """
    B, D = x.shape
    D2, C = w.shape
    assert D == D2
    b2 = jnp.reshape(b, (1, C)).astype(jnp.float32)

    budget, mxu = _tpu_generation()
    w_itemsize = jnp.dtype(compute_dtype).itemsize
    out_itemsize = jnp.dtype(out_dtype).itemsize
    tm, tn, c_out, resident = _plan(B, D, C, w_itemsize, out_itemsize, budget, mxu)

    w_p = w.astype(compute_dtype)
    if c_out != C:
        w_p = jnp.pad(w_p, ((0, 0), (0, c_out - C)))
        b2 = jnp.pad(b2, ((0, 0), (0, c_out - C)))

    gm = pl.cdiv(B, tm)      # no batch padding: partial last block is masked
    gn = pl.cdiv(c_out, tn)

    def kernel(x_ref, w_ref, b_ref, o_ref):
        a = x_ref[...].astype(compute_dtype)          # in-kernel cast (VPU)
        acc = jnp.dot(a, w_ref[...].astype(compute_dtype),
                      preferred_element_type=jnp.float32)
        o_ref[...] = (acc + b_ref[...]).astype(o_ref.dtype)

    bytes_accessed = (x.size * x.dtype.itemsize + w_p.size * w_itemsize
                      + b2.size * 4 + B * c_out * out_itemsize)

    def build(single_buffer_wb):
        wb_kw = dict(pipeline_mode=pl.Buffered(1)) if single_buffer_wb else {}
        return pl.pallas_call(
            kernel,
            out_shape=jax.ShapeDtypeStruct((B, c_out), out_dtype),
            grid_spec=pltpu.PrefetchScalarGridSpec(
                num_scalar_prefetch=0,
                grid=(gm, gn),
                in_specs=[
                    pl.BlockSpec((tm, D), lambda i, j: (i, 0)),           # x tile
                    pl.BlockSpec((D, tn), lambda i, j: (0, j), **wb_kw),  # weight
                    pl.BlockSpec((1, tn), lambda i, j: (0, j), **wb_kw),  # bias
                ],
                out_specs=pl.BlockSpec((tm, tn), lambda i, j: (i, j)),
            ),
            compiler_params=pltpu.CompilerParams(
                dimension_semantics=("parallel", "parallel"),
                vmem_limit_bytes=budget,
            ),
            cost_estimate=pl.CostEstimate(
                flops=2 * B * D * c_out,
                transcendentals=0,
                bytes_accessed=bytes_accessed,
            ),
        )

    try:
        out = build(resident)(x, w_p, b2)
    except Exception:
        if not resident:
            raise
        # pl.Buffered(1) rejected by this jax build: fall back to default
        # double-buffering (costs one extra resident-W copy of VMEM).
        out = build(False)(x, w_p, b2)

    return out if c_out == C else out[:, :C]


class GRDALinearClassifierPallas:
    """JAX/Pallas re-implementation of GRDALinearClassifier's forward."""

    def __init__(self, feature_dim, num_class, c=0.005, lam1=0.0, lam2=0.0, *, key):
        self.feature_dim = feature_dim
        self.num_class = num_class
        # gRDA hyperparameters kept for parity; they act on the optimizer, not fwd.
        self.c, self.lam1, self.lam2 = c, lam1, lam2
        kw, kb = jax.random.split(key)
        bound = 1.0 / float(feature_dim) ** 0.5
        # nn.Linear-style uniform init, stored (in_features, out_features).
        self.weight = jax.random.uniform(
            kw, (feature_dim, num_class), jnp.float32, -bound, bound)
        self.bias = jax.random.uniform(
            kb, (num_class,), jnp.float32, -bound, bound)
        # One-time low-precision copy so no per-call wrapper cast of W hits HBM.
        self.weight_lo = self.weight.astype(jnp.bfloat16)
        self.training = False

    def _head(self, x):
        return linear_pallas(x, self.weight_lo, self.bias)

    def __call__(self, *args):
        if self.training:
            data_s, data_t, label_s = args
            del label_s  # TODO(synk): only used by GRDAOutput's loss/regularizer.
            # Two independent kernel launches; no HBM concat of the two streams.
            return self._head(data_s), self._head(data_t)
        return self._head(args[0])


if __name__ == "__main__":
    key = jax.random.PRNGKey(0)
    k_model, k_s, k_t = jax.random.split(key, 3)

    batch, feature_dim, num_class = 8, 32, 8

    model = GRDALinearClassifierPallas(
        feature_dim, num_class, c=0.005, lam1=0.0001, lam2=3.0, key=k_model)

    data_t = jax.random.normal(k_t, (batch, feature_dim), jnp.float32)

    # eval path (single-input forward)
    logits = jax.block_until_ready(model(data_t))
    assert logits.shape == (batch, num_class)
    ref_t = data_t @ model.weight + model.bias
    assert jnp.allclose(logits, ref_t, atol=5e-2, rtol=5e-2), "eval mismatch"

    # training path (source + target streams through the same linear head)
    model.training = True
    data_s = jax.random.normal(k_s, (batch, feature_dim), jnp.float32)
    label_s = jnp.arange(batch) % num_class
    out_s, out_t = model(data_s, data_t, label_s)
    out_s, out_t = jax.block_until_ready((out_s, out_t))
    assert out_s.shape == (batch, num_class) and out_t.shape == (batch, num_class)
    ref_s = data_s @ model.weight + model.bias
    assert jnp.allclose(out_s, ref_s, atol=5e-2, rtol=5e-2), "train-path mismatch (s)"
    assert jnp.allclose(out_t, ref_t, atol=5e-2, rtol=5e-2), "train-path mismatch (t)"

    print("KERNEL_OK")
</pallas_src>

<mosaic_0001>
module attributes {stable_mosaic.version = 11 : i64} {
  func.func @kernel(%arg0: i32, %arg1: i32, %arg2: memref<8x32xf32, #tpu.memory_space<vmem>>, %arg3: memref<32x8xbf16, #tpu.memory_space<vmem>>, %arg4: memref<1x8xf32, #tpu.memory_space<vmem>>, %arg5: memref<8x8xf32, #tpu.memory_space<vmem>>) attributes {dimension_semantics = [#tpu.dimension_semantics<parallel>, #tpu.dimension_semantics<parallel>], iteration_bounds = array<i64: 1, 1>, scalar_prefetch = 0 : i64, scratch_operands = 0 : i64, tpu.core_type = #tpu.core_type<tc>, window_params = [{transform_indices = @transform_0, window_bounds = array<i64: 8, 32>}, {pipeline_mode = #tpu.pipeline_mode<synchronous>, transform_indices = @transform_1, window_bounds = array<i64: 32, 8>}, {pipeline_mode = #tpu.pipeline_mode<synchronous>, transform_indices = @transform_2, window_bounds = array<i64: 1, 8>}, {transform_indices = @transform_3, window_bounds = array<i64: 8, 8>}]} {
    %c0 = arith.constant 0 : index
    %c0_0 = arith.constant 0 : index
    %0 = vector.load %arg2[%c0, %c0_0] : memref<8x32xf32, #tpu.memory_space<vmem>>, vector<8x32xf32>
    %1 = arith.truncf %0 : vector<8x32xf32> to vector<8x32xbf16>
    %c0_1 = arith.constant 0 : index
    %c0_2 = arith.constant 0 : index
    %2 = vector.load %arg3[%c0_1, %c0_2] : memref<32x8xbf16, #tpu.memory_space<vmem>>, vector<32x8xbf16>
    %cst = arith.constant dense<0.000000e+00> : vector<8x8xf32>
    %3 = tpu.matmul %1, %2, %cst {dimension_numbers = #tpu.dot_dimension_numbers<[1], [0], [0], [1], [0, 0, 1, 1], [], []>} : vector<8x32xbf16>, vector<32x8xbf16>, vector<8x8xf32> -> vector<8x8xf32>
    %c0_3 = arith.constant 0 : index
    %c0_4 = arith.constant 0 : index
    %4 = vector.load %arg4[%c0_3, %c0_4] : memref<1x8xf32, #tpu.memory_space<vmem>>, vector<1x8xf32>
    %5 = vector.broadcast %4 : vector<1x8xf32> to vector<8x8xf32>
    %6 = arith.addf %3, %5 : vector<8x8xf32>
    %c0_5 = arith.constant 0 : index
    %c0_6 = arith.constant 0 : index
    %7 = vector.load %arg5[%c0_5, %c0_6] : memref<8x8xf32, #tpu.memory_space<vmem>>, vector<8x8xf32>
    tpu.vector_store %arg5[%c0_5, %c0_6], %6 {strides = array<i32>} : memref<8x8xf32, #tpu.memory_space<vmem>>, vector<8x8xf32>,
    return
  }
  func.func @transform_0(%arg0: i32, %arg1: i32) -> (i32, i32) {
    %c0_i32 = arith.constant 0 : i32
    %c0_i32_0 = arith.constant 0 : i32
    return %arg0, %c0_i32 : i32, i32
  }
  func.func @transform_1(%arg0: i32, %arg1: i32) -> (i32, i32) {
    %c0_i32 = arith.constant 0 : i32
    %c0_i32_0 = arith.constant 0 : i32
    return %c0_i32, %arg1 : i32, i32
  }
  func.func @transform_2(%arg0: i32, %arg1: i32) -> (i32, i32) {
    %c0_i32 = arith.constant 0 : i32
    %c0_i32_0 = arith.constant 0 : i32
    return %c0_i32, %arg1 : i32, i32
  }
  func.func @transform_3(%arg0: i32, %arg1: i32) -> (i32, i32) {
    %c0_i32 = arith.constant 0 : i32
    return %arg0, %arg1 : i32, i32
  }
}

module attributes {stable_mosaic.version = 11 : i64} {
  func.func @kernel(%arg0: i32, %arg1: i32, %arg2: memref<8x32xf32, #tpu.memory_space<vmem>>, %arg3: memref<32x8xbf16, #tpu.memory_space<vmem>>, %arg4: memref<1x8xf32, #tpu.memory_space<vmem>>, %arg5: memref<8x8xf32, #tpu.memory_space<vmem>>) attributes {dimension_semantics = [#tpu.dimension_semantics<parallel>, #tpu.dimension_semantics<parallel>], iteration_bounds = array<i64: 1, 1>, scalar_prefetch = 0 : i64, scratch_operands = 0 : i64, tpu.core_type = #tpu.core_type<tc>, window_params = [{transform_indices = @transform_0, window_bounds = array<i64: 8, 32>}, {transform_indices = @transform_1, window_bounds = array<i64: 32, 8>}, {transform_indices = @transform_2, window_bounds = array<i64: 1, 8>}, {transform_indices = @transform_3, window_bounds = array<i64: 8, 8>}]} {
    %c0 = arith.constant 0 : index
    %c0_0 = arith.constant 0 : index
    %0 = vector.load %arg2[%c0, %c0_0] : memref<8x32xf32, #tpu.memory_space<vmem>>, vector<8x32xf32>
    %1 = arith.truncf %0 : vector<8x32xf32> to vector<8x32xbf16>
    %c0_1 = arith.constant 0 : index
    %c0_2 = arith.constant 0 : index
    %2 = vector.load %arg3[%c0_1, %c0_2] : memref<32x8xbf16, #tpu.memory_space<vmem>>, vector<32x8xbf16>
    %cst = arith.constant dense<0.000000e+00> : vector<8x8xf32>
    %3 = tpu.matmul %1, %2, %cst {dimension_numbers = #tpu.dot_dimension_numbers<[1], [0], [0], [1], [0, 0, 1, 1], [], []>} : vector<8x32xbf16>, vector<32x8xbf16>, vector<8x8xf32> -> vector<8x8xf32>
    %c0_3 = arith.constant 0 : index
    %c0_4 = arith.constant 0 : index
    %4 = vector.load %arg4[%c0_3, %c0_4] : memref<1x8xf32, #tpu.memory_space<vmem>>, vector<1x8xf32>
    %5 = vector.broadcast %4 : vector<1x8xf32> to vector<8x8xf32>
    %6 = arith.addf %3, %5 : vector<8x8xf32>
    %c0_5 = arith.constant 0 : index
    %c0_6 = arith.constant 0 : index
    %7 = vector.load %arg5[%c0_5, %c0_6] : memref<8x8xf32, #tpu.memory_space<vmem>>, vector<8x8xf32>
    tpu.vector_store %arg5[%c0_5, %c0_6], %6 {strides = array<i32>} : memref<8x8xf32, #tpu.memory_space<vmem>>, vector<8x8xf32>,
    return
  }
  func.func @transform_0(%arg0: i32, %arg1: i32) -> (i32, i32) {
    %c0_i32 = arith.constant 0 : i32
    %c0_i32_0 = arith.constant 0 : i32
    return %arg0, %c0_i32 : i32, i32
  }
  func.func @transform_1(%arg0: i32, %arg1: i32) -> (i32, i32) {
    %c0_i32 = arith.constant 0 : i32
    %c0_i32_0 = arith.constant 0 : i32
    return %c0_i32, %arg1 : i32, i32
  }
  func.func @transform_2(%arg0: i32, %arg1: i32) -> (i32, i32) {
    %c0_i32 = arith.constant 0 : i32
    %c0_i32_0 = arith.constant 0 : i32
    return %c0_i32, %arg1 : i32, i32
  }
  func.func @transform_3(%arg0: i32, %arg1: i32) -> (i32, i32) {
    %c0_i32 = arith.constant 0 : i32
    return %arg0, %arg1 : i32, i32
  }
}

</mosaic_0001>

<llo_original>
// kernel: tpu_custom_call.1
$region0: #{tpu_custom_call.1}
  #allocation0 [shape = 'u32[]', space=smem, size = 0x4, offset = 0x4, fixed_abs, tag = 'smem constant byte address 0x4 - core index']
  #allocation1 [shape = 'u32[144,128]{1,0:T(1,128)}', space=vmem, size = 0x12000, scoped, tag = 'internal scratch']
  %s0 = inlined_call_operand.vmem [shape: f32[8,32], index: 0, kind: input, shape index: {}]
  %s1 = inlined_call_operand.vmem [shape: bf16[32,8], index: 1, kind: input, shape index: {}]
  %s2 = inlined_call_operand.vmem [shape: f32[1,8], index: 2, kind: input, shape index: {}]
  %s3 = inlined_call_operand.hbm [shape: f32[8,8], index: 3, kind: output, shape index: {}]
  %s4 = sld [smem:[#allocation0]]
  $region22: #{tpu_custom_call.1} parent=0
    _
  %s6 = ssub.s32 1, %s4
  %s7 = scalar_select 0, %s6, %s4
  $region1: #{tpu_custom_call.1} parent=0
    #allocation2 [shape = 'u8[4096]{0}', space=vmem, size = 0x1000, scoped, tag = 'output window, operand 0, single buffered']
    #allocation3 [shape = 's32[1]{0}', space=sflag, size = 0x4, scoped, tag = 'scoped memory for tpu_custom_call.1']
    %8 = vsyncpa [#allocation3], 0
    // Predicated region
    $region2: #{tpu_custom_call.1} parent=1 // pred_check
      _
    $region3: #{tpu_custom_call.1} parent=1 // pred_check_branch
      %10 = sbr.rel (0) target = $region5
    $region4: #{tpu_custom_call.1} parent=1 // pred_region
      _
    $region5: #{tpu_custom_call.1} parent=1 // pred_fallthru
      _
    // Predicated region
    $region6: #{tpu_custom_call.1} parent=1 // pred_check
      _
    $region7: #{tpu_custom_call.1} parent=1 // pred_check_branch
      %12 = sbr.rel (0) target = $region9
    $region8: #{tpu_custom_call.1} parent=1 // pred_region
      _
    $region9: #{tpu_custom_call.1} parent=1 // pred_fallthru
      _
    // Predicated region
    $region10: #{tpu_custom_call.1} parent=1 // pred_check
      _
    $region11: #{tpu_custom_call.1} parent=1 // pred_check_branch
      %14 = sbr.rel (0) target = $region13
    $region12: #{tpu_custom_call.1} parent=1 // pred_region
      _
    $region13: #{tpu_custom_call.1} parent=1 // pred_fallthru
      _
    %v16 = vld [vmem:[%s0] sm:$0xff]
    %v17 = vpack.c.bf16 %v16, %v16
    %v18 = vld [vmem:[%s1] sm:$0xf]
    %v19 = vld [vmem:[%s1 + $0x4] sm:$0xf]
    %v20 = vld [vmem:[%s1 + $0x8] sm:$0xf]
    %v21 = vld [vmem:[%s1 + $0xc] sm:$0xf]
    %v22 = vld [vmem:[%s2] sm:$0x1]
    %v24 = vlaneseq
    %v25 = vshrl.u32 %v24, 7
    %v26 = vsub.s32 0, %v25
    %v27 = vrot.slane %v22, %v26
    %v33 = vunpack.c.l.b16 %v18
    %v34 = vunpack.c.l.b16 %v19
    %v35 = vunpack.c.l.b16 %v20
    %v36 = vunpack.c.l.b16 %v21
    %v37 = vpack.c.b16 %v34, %v33
    %v38 = vpack.c.b16 %v36, %v35
    %vm41 = vcmask 261120
    %v43 = vsel %vm41, %v17, 0
    %45 = vmatprep.subr.bf16.mxu0 0
    %46 = vmatpush1.bf16.msra.mxu0 0
    %47 = vmatprep.subr.bf16.mxu0 0
    %48 = vmatpush1.bf16.msra.mxu0 0
    %49 = vmatprep.subr.bf16.mxu0 0
    %50 = vmatpush1.bf16.msra.mxu0 0
    %51 = vmatprep.subr.bf16.mxu0 0
    %52 = vmatpush1.bf16.msra.mxu0 0
    %53 = vmatprep.subr.bf16.mxu0 0
    %54 = vmatpush1.bf16.msra.mxu0 0
    %55 = vmatprep.subr.bf16.mxu0 0
    %56 = vmatpush1.bf16.msra.mxu0 0
    %57 = vmatprep.subr.bf16.mxu0 0
    %58 = vmatpush1.bf16.msra.mxu0 %v38
    %59 = vmatprep.subr.bf16.mxu0 0
    %60 = vmatpush1.bf16.msra.mxu0 %v37
    %61 = vmatprep.subr.bf16.mxu0 0
    %62 = vmatpush2.bf16.msra.mxu0 0
    %63 = vmatprep.subr.bf16.mxu0 0
    %64 = vmatpush2.bf16.msra.mxu0 0
    %65 = vmatprep.subr.bf16.mxu0 0
    %66 = vmatpush2.bf16.msra.mxu0 0
    %67 = vmatprep.subr.bf16.mxu0 0
    %68 = vmatpush2.bf16.msra.mxu0 0
    %69 = vmatprep.subr.bf16.mxu0 0
    %70 = vmatpush2.bf16.msra.mxu0 0
    %71 = vmatprep.subr.bf16.mxu0 0
    %72 = vmatpush2.bf16.msra.mxu0 0
    %73 = vmatprep.subr.bf16.mxu0 0
    %74 = vmatpush2.bf16.msra.mxu0 0
    %75 = vmatprep.subr.bf16.mxu0 0
    %76 = vmatpush2.bf16.msra.mxu0 0
    %77 = vmatprep.mubr.bf16.mxu0 0
    %78 = vmatmul.mubr.bf16.gmra.mxu0 %v43
    %v79 = vpop.f32.mrf.mxu0
    %v80 = vadd.f32 %v27, %v79
    %v81 = vpop.f32.mrf.mxu0
    %v82 = vpop.f32.mrf.mxu0
    %v83 = vpop.f32.mrf.mxu0
    %84 = vdwg.mxu0
    %vm85 = vcmask 64512
    %86 = vst.msk [vmem:[#allocation2] sm:$0xff] %vm85, %v80
    // Predicated region
    $region14: #{tpu_custom_call.1} parent=1 // pred_check
      _
    $region15: #{tpu_custom_call.1} parent=1 // pred_check_branch
      %88 = sbr.rel (0) target = $region17
    $region16: #{tpu_custom_call.1} parent=1 // pred_region
      %s90 = ssub.s32 128, 128
      %91 = vsyncadd [#allocation3], %s90
      %s93 = sshll.u32 [#allocation2], 4
      %s94 = int_to_ptr.vmem [resolvable:$true] %s93
      %96 = dma.vmem_to_hbm [thread:$0]  %s94, 128, %s3, [#allocation3]
    $region17: #{tpu_custom_call.1} parent=1 // pred_fallthru
      _
    // Predicated region
    $region18: #{tpu_custom_call.1} parent=1 // pred_check
      _
    $region19: #{tpu_custom_call.1} parent=1 // pred_check_branch
      %98 = sbr.rel (0) target = $region21
    $region20: #{tpu_custom_call.1} parent=1 // pred_region
      %99 = dma.done [#allocation3], 128
    $region21: #{tpu_custom_call.1} parent=1 // pred_fallthru
      _
    %100 = vsyncpa [#allocation3], 1

// kernel: tpu_custom_call.1
$region0: #{tpu_custom_call.1}
  #allocation0 [shape = 'u32[]', space=smem, size = 0x4, offset = 0x4, fixed_abs, tag = 'smem constant byte address 0x4 - core index']
  #allocation1 [shape = 'u32[144,128]{1,0:T(1,128)}', space=vmem, size = 0x12000, scoped, tag = 'internal scratch']
  %s0 = inlined_call_operand.vmem [shape: f32[8,32], index: 0, kind: input, shape index: {}]
  %s1 = inlined_call_operand.vmem [shape: bf16[32,8], index: 1, kind: input, shape index: {}]
  %s2 = inlined_call_operand.vmem [shape: f32[1,8], index: 2, kind: input, shape index: {}]
  %s3 = inlined_call_operand.hbm [shape: f32[8,8], index: 3, kind: output, shape index: {}]
  %s4 = sld [smem:[#allocation0]]
  $region22: #{tpu_custom_call.1} parent=0
    _
  %s6 = ssub.s32 1, %s4
  %s7 = scalar_select 0, %s6, %s4
  $region1: #{tpu_custom_call.1} parent=0
    #allocation2 [shape = 'u8[4096]{0}', space=vmem, size = 0x1000, scoped, tag = 'output window, operand 0, single buffered']
    #allocation3 [shape = 's32[1]{0}', space=sflag, size = 0x4, scoped, tag = 'scoped memory for tpu_custom_call.1']
    %8 = vsyncpa [#allocation3], 0
    // Predicated region
    $region2: #{tpu_custom_call.1} parent=1 // pred_check
      _
    $region3: #{tpu_custom_call.1} parent=1 // pred_check_branch
      %10 = sbr.rel (0) target = $region5
    $region4: #{tpu_custom_call.1} parent=1 // pred_region
      _
    $region5: #{tpu_custom_call.1} parent=1 // pred_fallthru
      _
    // Predicated region
    $region6: #{tpu_custom_call.1} parent=1 // pred_check
      _
    $region7: #{tpu_custom_call.1} parent=1 // pred_check_branch
      %12 = sbr.rel (0) target = $region9
    $region8: #{tpu_custom_call.1} parent=1 // pred_region
      _
    $region9: #{tpu_custom_call.1} parent=1 // pred_fallthru
      _
    // Predicated region
    $region10: #{tpu_custom_call.1} parent=1 // pred_check
      _
    $region11: #{tpu_custom_call.1} parent=1 // pred_check_branch
      %14 = sbr.rel (0) target = $region13
    $region12: #{tpu_custom_call.1} parent=1 // pred_region
      _
    $region13: #{tpu_custom_call.1} parent=1 // pred_fallthru
      _
    %v16 = vld [vmem:[%s0] sm:$0xff]
    %v17 = vpack.c.bf16 %v16, %v16
    %v18 = vld [vmem:[%s1] sm:$0xf]
    %v19 = vld [vmem:[%s1 + $0x4] sm:$0xf]
    %v20 = vld [vmem:[%s1 + $0x8] sm:$0xf]
    %v21 = vld [vmem:[%s1 + $0xc] sm:$0xf]
    %v22 = vld [vmem:[%s2] sm:$0x1]
    %v24 = vlaneseq
    %v25 = vshrl.u32 %v24, 7
    %v26 = vsub.s32 0, %v25
    %v27 = vrot.slane %v22, %v26
    %v33 = vunpack.c.l.b16 %v18
    %v34 = vunpack.c.l.b16 %v19
    %v35 = vunpack.c.l.b16 %v20
    %v36 = vunpack.c.l.b16 %v21
    %v37 = vpack.c.b16 %v34, %v33
    %v38 = vpack.c.b16 %v36, %v35
    %vm41 = vcmask 261120
    %v43 = vsel %vm41, %v17, 0
    %45 = vmatprep.subr.bf16.mxu0 0
    %46 = vmatpush1.bf16.msra.mxu0 0
    %47 = vmatprep.subr.bf16.mxu0 0
    %48 = vmatpush1.bf16.msra.mxu0 0
    %49 = vmatprep.subr.bf16.mxu0 0
    %50 = vmatpush1.bf16.msra.mxu0 0
    %51 = vmatprep.subr.bf16.mxu0 0
    %52 = vmatpush1.bf16.msra.mxu0 0
    %53 = vmatprep.subr.bf16.mxu0 0
    %54 = vmatpush1.bf16.msra.mxu0 0
    %55 = vmatprep.subr.bf16.mxu0 0
    %56 = vmatpush1.bf16.msra.mxu0 0
    %57 = vmatprep.subr.bf16.mxu0 0
    %58 = vmatpush1.bf16.msra.mxu0 %v38
    %59 = vmatprep.subr.bf16.mxu0 0
    %60 = vmatpush1.bf16.msra.mxu0 %v37
    %61 = vmatprep.subr.bf16.mxu0 0
    %62 = vmatpush2.bf16.msra.mxu0 0
    %63 = vmatprep.subr.bf16.mxu0 0
    %64 = vmatpush2.bf16.msra.mxu0 0
    %65 = vmatprep.subr.bf16.mxu0 0
    %66 = vmatpush2.bf16.msra.mxu0 0
    %67 = vmatprep.subr.bf16.mxu0 0
    %68 = vmatpush2.bf16.msra.mxu0 0
    %69 = vmatprep.subr.bf16.mxu0 0
    %70 = vmatpush2.bf16.msra.mxu0 0
    %71 = vmatprep.subr.bf16.mxu0 0
    %72 = vmatpush2.bf16.msra.mxu0 0
    %73 = vmatprep.subr.bf16.mxu0 0
    %74 = vmatpush2.bf16.msra.mxu0 0
    %75 = vmatprep.subr.bf16.mxu0 0
    %76 = vmatpush2.bf16.msra.mxu0 0
    %77 = vmatprep.mubr.bf16.mxu0 0
    %78 = vmatmul.mubr.bf16.gmra.mxu0 %v43
    %v79 = vpop.f32.mrf.mxu0
    %v80 = vadd.f32 %v27, %v79
    %v81 = vpop.f32.mrf.mxu0
    %v82 = vpop.f32.mrf.mxu0
    %v83 = vpop.f32.mrf.mxu0
    %84 = vdwg.mxu0
    %vm85 = vcmask 64512
    %86 = vst.msk [vmem:[#allocation2] sm:$0xff] %vm85, %v80
    // Predicated region
    $region14: #{tpu_custom_call.1} parent=1 // pred_check
      _
    $region15: #{tpu_custom_call.1} parent=1 // pred_check_branch
      %88 = sbr.rel (0) target = $region17
    $region16: #{tpu_custom_call.1} parent=1 // pred_region
      %s90 = ssub.s32 128, 128
      %91 = vsyncadd [#allocation3], %s90
      %s93 = sshll.u32 [#allocation2], 4
      %s94 = int_to_ptr.vmem [resolvable:$true] %s93
      %96 = dma.vmem_to_hbm [thread:$0]  %s94, 128, %s3, [#allocation3]
    $region17: #{tpu_custom_call.1} parent=1 // pred_fallthru
      _
    // Predicated region
    $region18: #{tpu_custom_call.1} parent=1 // pred_check
      _
    $region19: #{tpu_custom_call.1} parent=1 // pred_check_branch
      %98 = sbr.rel (0) target = $region21
    $region20: #{tpu_custom_call.1} parent=1 // pred_region
      %99 = dma.done [#allocation3], 128
    $region21: #{tpu_custom_call.1} parent=1 // pred_fallthru
      _
    %100 = vsyncpa [#allocation3], 1

</llo_original>
